<compile_context>
chip_gen: v6e
topology: v6e:2x2x1
jax: 0.10.0
libtpu: 0.0.40
codegen_flags: <defaults>
</compile_context>

<pallas_src>
import functools
import math

import jax
import jax.numpy as jnp
from jax.experimental import pallas as pl
from jax.experimental.pallas import tpu as pltpu

LN_EPS = 1e-5


# ---------------------------------------------------------------------------
# tiling helpers (adaptive: full-array blocks at toy sizes, aligned tiles at
# production sizes; ragged M handled by zero-padding rows + slicing back)
# ---------------------------------------------------------------------------

def _row_tile(m, preferred=256):
    """Row tile: whole array for small M, 256-row (8/128 aligned) tiles else."""
    return m if m <= preferred else preferred


def _col_tile(n, preferred=512):
    if n <= preferred:
        return n
    for cand in (512, 256, 128):
        if n % cand == 0:
            return cand
    return n


def _ff_tile(d_ff, preferred=2048):
    """d_ff slab: stream W1/W2 through VMEM in 128-aligned slabs."""
    if d_ff <= preferred:
        return d_ff
    for cand in (2048, 1024, 512, 256, 128):
        if d_ff % cand == 0:
            return cand
    return d_ff


def _pad_rows(x2d, tm):
    m = x2d.shape[0]
    m_pad = pl.cdiv(m, tm) * tm
    if m_pad != m:
        x2d = jnp.pad(x2d, ((0, m_pad - m), (0, 0)))
    return x2d, m


# ---------------------------------------------------------------------------
# generic linear:  y = x @ W + b   (bias optional; zeros used when absent)
# ---------------------------------------------------------------------------

def _linear_kernel(x_ref, w_ref, b_ref, o_ref):
    y = jnp.dot(x_ref[...], w_ref[...], preferred_element_type=jnp.float32)
    o_ref[...] = (y + b_ref[...]).astype(o_ref.dtype)


def linear(x2d, w, b=None):
    m, k = x2d.shape
    n = w.shape[1]
    if b is None:
        b = jnp.zeros((n,), w.dtype)
    b2 = b.reshape(1, n).astype(jnp.float32)

    tm = _row_tile(m)
    tn = _col_tile(n)
    x_p, m0 = _pad_rows(x2d, tm)
    mp = x_p.shape[0]

    out = pl.pallas_call(
        _linear_kernel,
        out_shape=jax.ShapeDtypeStruct((mp, n), x2d.dtype),
        grid_spec=pltpu.PrefetchScalarGridSpec(
            num_scalar_prefetch=0,
            grid=(mp // tm, n // tn),
            in_specs=[
                pl.BlockSpec((tm, k), lambda i, j: (i, 0)),
                pl.BlockSpec((k, tn), lambda i, j: (0, j)),
                pl.BlockSpec((1, tn), lambda i, j: (0, j)),
            ],
            out_specs=pl.BlockSpec((tm, tn), lambda i, j: (i, j)),
        ),
        compiler_params=pltpu.CompilerParams(
            dimension_semantics=("parallel", "parallel")),
    )(x_p, w, b2)
    return out[:m0]


# ---------------------------------------------------------------------------
# scaled dot-product attention core (one (batch, head) pair per grid step)
# TODO(synk): full (Sq, Sk) score tile per head; fine for short sequences —
#             switch to a flash-style online-softmax tiling for long seq.
# ---------------------------------------------------------------------------

def _attention_kernel(q_ref, k_ref, v_ref, mask_ref, o_ref, *, scale):
    q = q_ref[0]                       # (Sq, Dk)
    k = k_ref[0]                       # (Sk, Dk)
    v = v_ref[0]                       # (Sk, Dk)
    s = jnp.dot(q, k.T, preferred_element_type=jnp.float32) * scale
    s = jnp.where(mask_ref[0] == 0, -1e9, s)        # masked_fill(mask==0, -1e9)
    s_max = jnp.max(s, axis=-1, keepdims=True)
    p = jnp.exp(s - s_max)
    p = p / jnp.sum(p, axis=-1, keepdims=True)
    o = jnp.dot(p.astype(v.dtype), v, preferred_element_type=jnp.float32)
    o_ref[...] = o[None, :, :].astype(o_ref.dtype)


def _attention_core(q, k, v, mask, heads):
    # q: (B*H, Sq, Dk), k/v: (B*H, Sk, Dk), mask: (B, Sq, Sk)
    bh, sq, dk = q.shape
    sk = k.shape[1]
    scale = 1.0 / math.sqrt(dk)
    kern = functools.partial(_attention_kernel, scale=scale)
    return pl.pallas_call(
        kern,
        out_shape=jax.ShapeDtypeStruct((bh, sq, dk), q.dtype),
        grid_spec=pltpu.PrefetchScalarGridSpec(
            num_scalar_prefetch=0,
            grid=(bh,),
            in_specs=[
                pl.BlockSpec((1, sq, dk), lambda i: (i, 0, 0)),
                pl.BlockSpec((1, sk, dk), lambda i: (i, 0, 0)),
                pl.BlockSpec((1, sk, dk), lambda i: (i, 0, 0)),
                pl.BlockSpec((1, sq, sk), lambda i: (i // heads, 0, 0)),
            ],
            out_specs=pl.BlockSpec((1, sq, dk), lambda i: (i, 0, 0)),
        ),
        compiler_params=pltpu.CompilerParams(
            dimension_semantics=("parallel",)),
    )(q, k, v, mask)


def multi_head_attention(q_in, k_in, v_in, mask, ap):
    b, sq, d = q_in.shape
    sk = k_in.shape[1]
    h = ap["heads"]
    dk = d // h

    def split(x2d, s):
        # (B*s, d) -> (B*H, s, dk)
        return (x2d.reshape(b, s, h, dk)
                    .transpose(0, 2, 1, 3)
                    .reshape(b * h, s, dk))

    q = split(linear(q_in.reshape(-1, d), ap["wq"]), sq)
    k = split(linear(k_in.reshape(-1, d), ap["wk"]), sk)
    v = split(linear(v_in.reshape(-1, d), ap["wv"]), sk)

    attn = _attention_core(q, k, v, mask, h)            # (B*H, Sq, dk)
    attn = (attn.reshape(b, h, sq, dk)
                .transpose(0, 2, 1, 3)
                .reshape(b * sq, d))
    out = linear(attn, ap["wo"], ap["bo"])
    return out.reshape(b, sq, d)


# ---------------------------------------------------------------------------
# fused residual add + LayerNorm
# ---------------------------------------------------------------------------

def _add_ln_kernel(x_ref, r_ref, g_ref, b_ref, o_ref):
    s = x_ref[...].astype(jnp.float32) + r_ref[...].astype(jnp.float32)
    mu = jnp.mean(s, axis=-1, keepdims=True)
    c = s - mu
    var = jnp.mean(c * c, axis=-1, keepdims=True)
    inv = jax.lax.rsqrt(var + LN_EPS)
    o_ref[...] = (c * inv * g_ref[...] + b_ref[...]).astype(o_ref.dtype)


def add_layer_norm(x, r, gamma, beta):
    shape = x.shape
    d = shape[-1]
    x2d = x.reshape(-1, d)
    r2d = r.reshape(-1, d)
    m = x2d.shape[0]
    tm = _row_tile(m)
    x_p, m0 = _pad_rows(x2d, tm)
    r_p, _ = _pad_rows(r2d, tm)
    mp = x_p.shape[0]
    g2 = gamma.reshape(1, d).astype(jnp.float32)
    b2 = beta.reshape(1, d).astype(jnp.float32)

    out = pl.pallas_call(
        _add_ln_kernel,
        out_shape=jax.ShapeDtypeStruct((mp, d), x.dtype),
        grid_spec=pltpu.PrefetchScalarGridSpec(
            num_scalar_prefetch=0,
            grid=(mp // tm,),
            in_specs=[
                pl.BlockSpec((tm, d), lambda i: (i, 0)),
                pl.BlockSpec((tm, d), lambda i: (i, 0)),
                pl.BlockSpec((1, d), lambda i: (0, 0)),
                pl.BlockSpec((1, d), lambda i: (0, 0)),
            ],
            out_specs=pl.BlockSpec((tm, d), lambda i: (i, 0)),
        ),
        compiler_params=pltpu.CompilerParams(
            dimension_semantics=("parallel",)),
    )(x_p, r_p, g2, b2)
    return out[:m0].reshape(shape)


# ---------------------------------------------------------------------------
# fused position-wise FFN:  y = relu(x @ W1 + b1) @ W2 + b2
# grid = (M tiles [parallel], d_ff slabs [arbitrary, reduction, last axis])
# ---------------------------------------------------------------------------

def _ffn_kernel(x_ref, w1_ref, b1_ref, w2_ref, b2_ref, o_ref, acc_ref):
    j = pl.program_id(1)

    @pl.when(j == 0)
    def _():
        # fold fc2 bias into the accumulator init: one broadcast per M tile,
        # outside the d_ff reduction sweep.
        acc_ref[...] = jnp.broadcast_to(
            b2_ref[...].astype(jnp.float32), acc_ref.shape)

    h = jnp.dot(x_ref[...], w1_ref[...], preferred_element_type=jnp.float32)
    h = jnp.maximum(h + b1_ref[...].astype(jnp.float32), 0.0)     # ReLU in f32
    acc_ref[...] += jnp.dot(h.astype(w2_ref.dtype), w2_ref[...],
                            preferred_element_type=jnp.float32)

    @pl.when(j == pl.num_programs(1) - 1)
    def _():
        o_ref[...] = acc_ref[...].astype(o_ref.dtype)


def position_wise_ffn(x, w1, b1, w2, b2, *, compute_dtype=None):
    shape = x.shape
    d_model = shape[-1]
    d_ff = w1.shape[1]
    x2d = x.reshape(-1, d_model)

    tm = _row_tile(x2d.shape[0])     # <=256 rows per tile (8/128 aligned)
    tf = _ff_tile(d_ff)              # 128-aligned d_ff slab, streamed
    x_p, m0 = _pad_rows(x2d, tm)
    mp = x_p.shape[0]

    if compute_dtype is not None:
        # Optional bf16 (fp8 on v7x) MXU operands; accumulation stays f32.
        x_p = x_p.astype(compute_dtype)
        w1 = w1.astype(compute_dtype)
        w2 = w2.astype(compute_dtype)

    b1_2d = b1.reshape(1, d_ff).astype(jnp.float32)
    b2_2d = b2.reshape(1, d_model).astype(jnp.float32)

    itemsize = jnp.dtype(x_p.dtype).itemsize
    # rough VMEM budget: double-buffered tiles + f32 accumulator
    vmem_needed = (2 * itemsize * (2 * tm * d_model + 2 * d_model * tf)
                   + 4 * (tm * d_model + d_ff + d_model))
    vmem_limit = None
    if vmem_needed > 24 * 1024 * 1024:      # raise scoped limit only if needed
        vmem_limit = min(int(vmem_needed * 1.5), 100 * 1024 * 1024)

    cost = pl.CostEstimate(
        flops=4 * mp * d_model * d_ff,
        transcendentals=0,
        bytes_accessed=int(itemsize * (2 * mp * d_model
                                       + (mp // tm) * (w1.size + w2.size))
                           + 4 * (d_ff + d_model)),
    )

    out = pl.pallas_call(
        _ffn_kernel,
        out_shape=jax.ShapeDtypeStruct((mp, d_model), x.dtype),
        grid_spec=pltpu.PrefetchScalarGridSpec(
            num_scalar_prefetch=0,
            grid=(mp // tm, d_ff // tf),               # reduction axis last
            in_specs=[
                pl.BlockSpec((tm, d_model), lambda i, j: (i, 0)),   # x tile
                pl.BlockSpec((d_model, tf), lambda i, j: (0, j)),   # W1 slab
                pl.BlockSpec((1, tf), lambda i, j: (0, j)),         # b1 slab
                pl.BlockSpec((tf, d_model), lambda i, j: (j, 0)),   # W2 slab
                pl.BlockSpec((1, d_model), lambda i, j: (0, 0)),    # b2
            ],
            out_specs=pl.BlockSpec((tm, d_model), lambda i, j: (i, 0)),
            scratch_shapes=[pltpu.VMEM((tm, d_model), jnp.float32)],
        ),
        compiler_params=pltpu.CompilerParams(
            dimension_semantics=("parallel", "arbitrary"),
            vmem_limit_bytes=vmem_limit),
        cost_estimate=cost,
    )(x_p, w1, b1_2d, w2, b2_2d)

    return out[:m0].reshape(shape)


# ---------------------------------------------------------------------------
# DecoderBlock forward
# ---------------------------------------------------------------------------

def decoder_block(x, encoder_output, source_mask, target_mask, params):
    attn = multi_head_attention(x, x, x, target_mask, params["attn"])
    x = add_layer_norm(x, attn, params["ln1_g"], params["ln1_b"])
    # cross-attention reuses the SAME attention weights (as in the PyTorch module)
    attn = multi_head_attention(x, encoder_output, encoder_output,
                                source_mask, params["attn"])
    x = add_layer_norm(x, attn, params["ln2_g"], params["ln2_b"])
    ffn = position_wise_ffn(x, params["w1"], params["b1"],
                            params["w2"], params["b2"])
    x = add_layer_norm(x, ffn, params["ln3_g"], params["ln3_b"])
    return x


def init_params(key, d_model, heads, d_ff, dtype=jnp.float32):
    ks = jax.random.split(key, 9)
    bm = 1.0 / math.sqrt(d_model)
    bf = 1.0 / math.sqrt(d_ff)
    u = lambda k, shape, bnd: jax.random.uniform(k, shape, dtype, -bnd, bnd)
    return {
        "attn": {
            "heads": heads,
            "wq": u(ks[0], (d_model, d_model), bm),
            "wk": u(ks[1], (d_model, d_model), bm),
            "wv": u(ks[2], (d_model, d_model), bm),
            "wo": u(ks[3], (d_model, d_model), bm),
            "bo": u(ks[4], (d_model,), bm),
        },
        "w1": u(ks[5], (d_model, d_ff), bm),
        "b1": u(ks[6], (d_ff,), bm),
        "w2": u(ks[7], (d_ff, d_model), bf),
        "b2": u(ks[8], (d_model,), bf),
        "ln1_g": jnp.ones((d_model,), dtype), "ln1_b": jnp.zeros((d_model,), dtype),
        "ln2_g": jnp.ones((d_model,), dtype), "ln2_b": jnp.zeros((d_model,), dtype),
        "ln3_g": jnp.ones((d_model,), dtype), "ln3_b": jnp.zeros((d_model,), dtype),
    }


# ---------------------------------------------------------------------------
# plain-JAX reference (mirrors the PyTorch module math exactly)
# ---------------------------------------------------------------------------

def reference_decoder_block(x, enc, src_mask, tgt_mask, p):
    def mha_ref(q_in, k_in, v_in, mask, ap):
        b, sq, d = q_in.shape
        h = ap["heads"]; dk = d // h
        split = lambda t: t.reshape(b, -1, h, dk).transpose(0, 2, 1, 3)
        q = split(q_in @ ap["wq"])
        k = split(k_in @ ap["wk"])
        v = split(v_in @ ap["wv"])
        s = (q @ k.transpose(0, 1, 3, 2)) / math.sqrt(dk)
        s = jnp.where(mask[:, None, :, :] == 0, -1e9, s)
        pr = jax.nn.softmax(s, axis=-1)
        o = (pr @ v).transpose(0, 2, 1, 3).reshape(b, sq, d)
        return o @ ap["wo"] + ap["bo"]

    def ln_ref(t, g, bb):
        mu = t.mean(-1, keepdims=True)
        var = ((t - mu) ** 2).mean(-1, keepdims=True)
        return (t - mu) / jnp.sqrt(var + LN_EPS) * g + bb

    a = mha_ref(x, x, x, tgt_mask, p["attn"])
    x = ln_ref(x + a, p["ln1_g"], p["ln1_b"])
    a = mha_ref(x, enc, enc, src_mask, p["attn"])
    x = ln_ref(x + a, p["ln2_g"], p["ln2_b"])
    f = jnp.maximum(x @ p["w1"] + p["b1"], 0.0) @ p["w2"] + p["b2"]
    x = ln_ref(x + f, p["ln3_g"], p["ln3_b"])
    return x


if __name__ == "__main__":
    key = jax.random.PRNGKey(0)
    kx, ke, kp = jax.random.split(key, 3)

    batch, seq, src_seq = 2, 8, 8
    d_model, heads, d_ff = 32, 4, 64

    x = jax.random.normal(kx, (batch, seq, d_model), jnp.float32)
    enc_out = jax.random.normal(ke, (batch, src_seq, d_model), jnp.float32)

    # mask semantics match masked_fill(mask == 0, -1e9): 0 = masked position
    target_mask = jnp.tile(jnp.tril(jnp.ones((seq, seq), jnp.float32))[None],
                           (batch, 1, 1))
    source_mask = jnp.ones((batch, seq, src_seq), jnp.float32)

    params = init_params(kp, d_model, heads, d_ff)

    y = decoder_block(x, enc_out, source_mask, target_mask, params)
    y = jax.block_until_ready(y)

    ref = reference_decoder_block(x, enc_out, source_mask, target_mask, params)
    assert y.shape == x.shape
    assert jnp.allclose(y, ref, atol=2e-4, rtol=2e-4), \
        float(jnp.abs(y - ref).max())

    print("KERNEL_OK")
</pallas_src>

<mosaic_0001>
module attributes {stable_mosaic.version = 11 : i64} {
  func.func @_linear_kernel(%arg0: i32, %arg1: i32, %arg2: memref<16x32xf32, #tpu.memory_space<vmem>>, %arg3: memref<32x32xf32, #tpu.memory_space<vmem>>, %arg4: memref<1x32xf32, #tpu.memory_space<vmem>>, %arg5: memref<16x32xf32, #tpu.memory_space<vmem>>) attributes {dimension_semantics = [#tpu.dimension_semantics<parallel>, #tpu.dimension_semantics<parallel>], iteration_bounds = array<i64: 1, 1>, scalar_prefetch = 0 : i64, scratch_operands = 0 : i64, tpu.core_type = #tpu.core_type<tc>, window_params = [{transform_indices = @transform_0, window_bounds = array<i64: 16, 32>}, {transform_indices = @transform_1, window_bounds = array<i64: 32, 32>}, {transform_indices = @transform_2, window_bounds = array<i64: 1, 32>}, {transform_indices = @transform_3, window_bounds = array<i64: 16, 32>}]} {
    %c0 = arith.constant 0 : index
    %c0_0 = arith.constant 0 : index
    %0 = vector.load %arg2[%c0, %c0_0] : memref<16x32xf32, #tpu.memory_space<vmem>>, vector<16x32xf32>
    %c0_1 = arith.constant 0 : index
    %c0_2 = arith.constant 0 : index
    %1 = vector.load %arg3[%c0_1, %c0_2] : memref<32x32xf32, #tpu.memory_space<vmem>>, vector<32x32xf32>
    %cst = arith.constant dense<0.000000e+00> : vector<16x32xf32>
    %2 = tpu.matmul %0, %1, %cst {dimension_numbers = #tpu.dot_dimension_numbers<[1], [0], [0], [1], [0, 0, 1, 1], [], []>} : vector<16x32xf32>, vector<32x32xf32>, vector<16x32xf32> -> vector<16x32xf32>
    %c0_3 = arith.constant 0 : index
    %c0_4 = arith.constant 0 : index
    %3 = vector.load %arg4[%c0_3, %c0_4] : memref<1x32xf32, #tpu.memory_space<vmem>>, vector<1x32xf32>
    %4 = vector.broadcast %3 : vector<1x32xf32> to vector<16x32xf32>
    %5 = arith.addf %2, %4 : vector<16x32xf32>
    %c0_5 = arith.constant 0 : index
    %c0_6 = arith.constant 0 : index
    %6 = vector.load %arg5[%c0_5, %c0_6] : memref<16x32xf32, #tpu.memory_space<vmem>>, vector<16x32xf32>
    tpu.vector_store %arg5[%c0_5, %c0_6], %5 {strides = array<i32>} : memref<16x32xf32, #tpu.memory_space<vmem>>, vector<16x32xf32>,
    return
  }
  func.func @transform_0(%arg0: i32, %arg1: i32) -> (i32, i32) {
    %c0_i32 = arith.constant 0 : i32
    %c0_i32_0 = arith.constant 0 : i32
    return %arg0, %c0_i32 : i32, i32
  }
  func.func @transform_1(%arg0: i32, %arg1: i32) -> (i32, i32) {
    %c0_i32 = arith.constant 0 : i32
    %c0_i32_0 = arith.constant 0 : i32
    return %c0_i32, %arg1 : i32, i32
  }
  func.func @transform_2(%arg0: i32, %arg1: i32) -> (i32, i32) {
    %c0_i32 = arith.constant 0 : i32
    %c0_i32_0 = arith.constant 0 : i32
    return %c0_i32, %arg1 : i32, i32
  }
  func.func @transform_3(%arg0: i32, %arg1: i32) -> (i32, i32) {
    %c0_i32 = arith.constant 0 : i32
    return %arg0, %arg1 : i32, i32
  }
}

</mosaic_0001>

<llo_original>
// kernel: tpu_custom_call.1
$region0: #{tpu_custom_call.1}
  #allocation0 [shape = 'u32[]', space=smem, size = 0x4, offset = 0x4, fixed_abs, tag = 'smem constant byte address 0x4 - core index']
  #allocation1 [shape = 'u32[144,128]{1,0:T(1,128)}', space=vmem, size = 0x12000, scoped, tag = 'internal scratch']
  %s0 = inlined_call_operand.hbm [shape: f32[16,32], index: 0, kind: input, shape index: {}]
  %s1 = inlined_call_operand.hbm [shape: f32[32,32], index: 1, kind: input, shape index: {}]
  %s2 = inlined_call_operand.vmem [shape: f32[1,32], index: 2, kind: input, shape index: {}]
  %s3 = inlined_call_operand.hbm [shape: f32[16,32], index: 3, kind: output, shape index: {}]
  %s4 = sld [smem:[#allocation0]]
  $region30: #{tpu_custom_call.1} parent=0
    _
  %s6 = ssub.s32 1, %s4
  %s7 = scalar_select 0, %s6, %s4
  $region1: #{tpu_custom_call.1} parent=0
    #allocation2 [shape = 'u8[8192]{0}', space=vmem, size = 0x2000, scoped, tag = 'input window, operand 0, single buffered']
    #allocation3 [shape = 's32[1]{0}', space=sflag, size = 0x4, scoped, tag = 'scoped memory for tpu_custom_call.1']
    #allocation4 [shape = 's32[1]{0}', space=sflag, size = 0x4, scoped, tag = 'scoped memory for tpu_custom_call.1']
    #allocation5 [shape = 'u8[16384]{0}', space=vmem, size = 0x4000, scoped, tag = 'input window, operand 1, single buffered']
    #allocation6 [shape = 's32[1]{0}', space=sflag, size = 0x4, scoped, tag = 'scoped memory for tpu_custom_call.1']
    #allocation7 [shape = 'u8[8192]{0}', space=vmem, size = 0x2000, scoped, tag = 'output window, operand 0, single buffered']
    %8 = vsyncpa [#allocation3], 0
    %9 = vsyncpa [#allocation6], 0
    %10 = vsyncpa [#allocation4], 0
    // Predicated region
    $region2: #{tpu_custom_call.1} parent=1 // pred_check
      _
    $region3: #{tpu_custom_call.1} parent=1 // pred_check_branch
      %12 = sbr.rel (0) target = $region5
    $region4: #{tpu_custom_call.1} parent=1 // pred_region
      %s14 = ssub.s32 256, 256
      %15 = vsyncadd [#allocation3], %s14
      %s16 = sshll.u32 [#allocation2], 4
      %s17 = int_to_ptr.vmem [resolvable:$true] %s16
      %22 = dma.hbm_to_vmem [thread:$0]  %s0, 256, %s17, [#allocation3], 128, 128, 8
    $region5: #{tpu_custom_call.1} parent=1 // pred_fallthru
      _
    // Predicated region
    $region6: #{tpu_custom_call.1} parent=1 // pred_check
      _
    $region7: #{tpu_custom_call.1} parent=1 // pred_check_branch
      %24 = sbr.rel (0) target = $region9
    $region8: #{tpu_custom_call.1} parent=1 // pred_region
      %s26 = ssub.s32 512, 512
      %27 = vsyncadd [#allocation6], %s26
      %s28 = sshll.u32 [#allocation5], 4
      %s29 = int_to_ptr.vmem [resolvable:$true] %s28
      %34 = dma.hbm_to_vmem [thread:$0]  %s1, 512, %s29, [#allocation6], 128, 128, 8
    $region9: #{tpu_custom_call.1} parent=1 // pred_fallthru
      _
    // Predicated region
    $region10: #{tpu_custom_call.1} parent=1 // pred_check
      _
    $region11: #{tpu_custom_call.1} parent=1 // pred_check_branch
      %36 = sbr.rel (0) target = $region13
    $region12: #{tpu_custom_call.1} parent=1 // pred_region
      _
    $region13: #{tpu_custom_call.1} parent=1 // pred_fallthru
      _
    // Predicated region
    $region14: #{tpu_custom_call.1} parent=1 // pred_check
      _
    $region15: #{tpu_custom_call.1} parent=1 // pred_check_branch
      %38 = sbr.rel (0) target = $region17
    $region16: #{tpu_custom_call.1} parent=1 // pred_region
      %39 = dma.done [#allocation3], 256
    $region17: #{tpu_custom_call.1} parent=1 // pred_fallthru
      _
    // Predicated region
    $region18: #{tpu_custom_call.1} parent=1 // pred_check
      _
    $region19: #{tpu_custom_call.1} parent=1 // pred_check_branch
      %41 = sbr.rel (0) target = $region21
    $region20: #{tpu_custom_call.1} parent=1 // pred_region
      %42 = dma.done [#allocation6], 512
    $region21: #{tpu_custom_call.1} parent=1 // pred_fallthru
      _
    %v43 = vld [vmem:[#allocation2] sm:$0xff]
    %v44 = vld [vmem:[#allocation2 + $0x8] sm:$0xff]
    %v45 = vld [vmem:[#allocation5] sm:$0xff]
    %v46 = vld [vmem:[#allocation5 + $0x8] sm:$0xff]
    %v47 = vld [vmem:[#allocation5 + $0x10] sm:$0xff]
    %v48 = vld [vmem:[#allocation5 + $0x18] sm:$0xff]
    %v49 = vld [vmem:[%s2] sm:$0x1]
    %v51 = vlaneseq
    %v52 = vshrl.u32 %v51, 7
    %v53 = vsub.s32 0, %v52
    %v54 = vrot.slane %v49, %v53
    %vm56 = vcmask 261120
    %v58 = vsel %vm56, %v43, 0
    %v61 = vsel %vm56, %v44, 0
    %63 = vmatprep.subr.mxu0 0.0
    %64 = vmatpush1.msra.mxu0 0.0
    %65 = vmatprep.subr.mxu0 0.0
    %66 = vmatpush1.msra.mxu0 0.0
    %67 = vmatprep.subr.mxu0 0.0
    %68 = vmatpush1.msra.mxu0 0.0
    %69 = vmatprep.subr.mxu0 0.0
    %70 = vmatpush1.msra.mxu0 0.0
    %71 = vmatprep.subr.mxu0 0.0
    %72 = vmatpush1.msra.mxu0 0.0
    %73 = vmatprep.subr.mxu0 0.0
    %74 = vmatpush1.msra.mxu0 0.0
    %75 = vmatprep.subr.mxu0 0.0
    %76 = vmatpush1.msra.mxu0 0.0
    %77 = vmatprep.subr.mxu0 0.0
    %78 = vmatpush1.msra.mxu0 0.0
    %79 = vmatprep.subr.mxu0 0.0
    %80 = vmatpush1.msra.mxu0 0.0
    %81 = vmatprep.subr.mxu0 0.0
    %82 = vmatpush1.msra.mxu0 0.0
    %83 = vmatprep.subr.mxu0 0.0
    %84 = vmatpush1.msra.mxu0 0.0
    %85 = vmatprep.subr.mxu0 0.0
    %86 = vmatpush1.msra.mxu0 0.0
    %87 = vmatprep.subr.mxu0 0.0
    %88 = vmatpush1.msra.mxu0 %v48
    %89 = vmatprep.subr.mxu0 0.0
    %90 = vmatpush1.msra.mxu0 %v47
    %91 = vmatprep.subr.mxu0 0.0
    %92 = vmatpush1.msra.mxu0 %v46
    %93 = vmatprep.subr.mxu0 0.0
    %94 = vmatpush1.msra.mxu0 %v45
    %95 = vmatprep.subr.mxu0 0.0
    %96 = vmatpush2.msra.mxu0 0.0
    %97 = vmatprep.subr.mxu0 0.0
    %98 = vmatpush2.msra.mxu0 0.0
    %99 = vmatprep.subr.mxu0 0.0
    %100 = vmatpush2.msra.mxu0 0.0
    %101 = vmatprep.subr.mxu0 0.0
    %102 = vmatpush2.msra.mxu0 0.0
    %103 = vmatprep.subr.mxu0 0.0
    %104 = vmatpush2.msra.mxu0 0.0
    %105 = vmatprep.subr.mxu0 0.0
    %106 = vmatpush2.msra.mxu0 0.0
    %107 = vmatprep.subr.mxu0 0.0
    %108 = vmatpush2.msra.mxu0 0.0
    %109 = vmatprep.subr.mxu0 0.0
    %110 = vmatpush2.msra.mxu0 0.0
    %111 = vmatprep.subr.mxu0 0.0
    %112 = vmatpush2.msra.mxu0 0.0
    %113 = vmatprep.subr.mxu0 0.0
    %114 = vmatpush2.msra.mxu0 0.0
    %115 = vmatprep.subr.mxu0 0.0
    %116 = vmatpush2.msra.mxu0 0.0
    %117 = vmatprep.subr.mxu0 0.0
    %118 = vmatpush2.msra.mxu0 0.0
    %119 = vmatprep.subr.mxu0 0.0
    %120 = vmatpush2.msra.mxu0 0.0
    %121 = vmatprep.subr.mxu0 0.0
    %122 = vmatpush2.msra.mxu0 0.0
    %123 = vmatprep.subr.mxu0 0.0
    %124 = vmatpush2.msra.mxu0 0.0
    %125 = vmatprep.subr.mxu0 0.0
    %126 = vmatpush2.msra.mxu0 0.0
    %127 = vmatprep.mubr.f32.mxu0 0.0
    %128 = vmatmul.mubr.f32.gmra.mxu0 %v58
    %v129 = vpop.f32.mrf.mxu0
    %v130 = vadd.f32 %v54, %v129
    %v131 = vpop.f32.mrf.mxu0
    %132 = vmatprep.mubr.f32.mxu0 0.0
    %133 = vmatmul.mubr.f32.gmra.mxu0 %v61
    %v134 = vpop.f32.mrf.mxu0
    %v135 = vadd.f32 %v54, %v134
    %v136 = vpop.f32.mrf.mxu0
    %137 = vdwg.mxu0
    %138 = vst.msk [vmem:[#allocation7] sm:$0xff] %vm56, %v130
    %139 = vst.msk [vmem:[#allocation7 + $0x8] sm:$0xff] %vm56, %v135
    // Predicated region
    $region22: #{tpu_custom_call.1} parent=1 // pred_check
      _
    $region23: #{tpu_custom_call.1} parent=1 // pred_check_branch
      %141 = sbr.rel (0) target = $region25
    $region24: #{tpu_custom_call.1} parent=1 // pred_region
      %s143 = ssub.s32 256, 256
      %144 = vsyncadd [#allocation4], %s143
      %s145 = sshll.u32 [#allocation7], 4
      %s146 = int_to_ptr.vmem [resolvable:$true] %s145
      %151 = dma.vmem_to_hbm [thread:$0]  %s146, 256, %s3, [#allocation4], 128, 128, 8
    $region25: #{tpu_custom_call.1} parent=1 // pred_fallthru
      _
    // Predicated region
    $region26: #{tpu_custom_call.1} parent=1 // pred_check
      _
    $region27: #{tpu_custom_call.1} parent=1 // pred_check_branch
      %153 = sbr.rel (0) target = $region29
    $region28: #{tpu_custom_call.1} parent=1 // pred_region
      %154 = dma.done [#allocation4], 256
    $region29: #{tpu_custom_call.1} parent=1 // pred_fallthru
      _
    %155 = vsyncpa [#allocation3], 1
    %156 = vsyncpa [#allocation6], 1
    %157 = vsyncpa [#allocation4], 1

</llo_original>
